<compile_context>
chip_gen: v5e
topology: v5e:2x2
jax: 0.10.0
libtpu: 0.0.40
codegen_flags: <defaults>
</compile_context>

<pallas_src>
import functools

import numpy as np
import jax
import jax.numpy as jnp
from jax.experimental import pallas as pl
from jax.experimental.pallas import tpu as pltpu


def _moving_avg_kernel(x_ref, o_ref, *, kernel_size: int, channels: int):
    """x_ref block: (tl, kernel_size*channels); o_ref block: (tl, channels).

    Each x_ref row is one full averaging window laid out contiguously:
    [w0c0 .. w0c_{C-1}, w1c0, ...].  Sum the k channel-wide lane slices in
    float32 (exact vs. the f32 reference; avoids drift for sub-32-bit inputs).
    """
    acc = x_ref[:, pl.ds(0, channels)].astype(jnp.float32)
    for w in range(1, kernel_size):
        acc = acc + x_ref[:, pl.ds(w * channels, channels)].astype(jnp.float32)
    o_ref[...] = (acc * (1.0 / kernel_size)).astype(o_ref.dtype)


def _reference(x, k):
    """Plain-JAX reference with avg_pool1d floor/truncation semantics."""
    b, l, c = x.shape
    lo = l // k
    if lo == 0:
        return jnp.zeros((b, 0, c), x.dtype)
    xr = x[:, : lo * k, :].reshape(b, lo, k, c).astype(jnp.float32)
    return xr.mean(axis=2).astype(x.dtype)


def moving_avg(x, kernel_size, *, block_rows=None,
               target_block_bytes: int = 4 * 1024 * 1024,
               min_pallas_bytes: int = 64 * 1024):
    """Non-overlapping moving average over axis 1 of a (B, L, C) array."""
    if x is None:
        return None
    convert_numpy = isinstance(x, np.ndarray)
    x = jnp.asarray(x)
    kernel_size = int(kernel_size)
    b, l, c = x.shape
    l_out = l // kernel_size
    if l_out == 0:                                   # L < kernel_size -> empty
        out = jnp.zeros((b, 0, c), x.dtype)
        return np.asarray(out) if convert_numpy else out

    l_used = l_out * kernel_size
    # Trim the partial trailing window outside the kernel (floor semantics) so
    # block DMAs never touch it.
    x_trim = x[:, :l_used, :] if l_used != l else x

    itemsize = jnp.dtype(x.dtype).itemsize
    if b * l_used * c * itemsize < min_pallas_bytes:
        # Tiny input: pallas_call launch overhead dominates; use fused XLA path.
        out = _reference(x_trim, kernel_size)
        return np.asarray(out) if convert_numpy else out

    rows_out = b * l_out
    row_width = kernel_size * c
    # Zero-copy: windows never straddle batches because l_used % k == 0, so the
    # flattening to one window per row is exact.
    x_windows = x_trim.reshape(rows_out, row_width)

    sublane = max(8, 32 // itemsize)       # 8 f32, 16 bf16, 32 int8/fp8
    lane_padded_width = pl.cdiv(row_width, 128) * 128
    lane_padded_c = pl.cdiv(c, 128) * 128

    # Row-tile size from the PADDED per-row VMEM footprint, rounded to the
    # sublane packing, clamped to rows_out (full-dim block is always legal).
    if block_rows is None:
        tl = target_block_bytes // max(1, lane_padded_width * itemsize)
    else:
        tl = int(block_rows)
    tl = max(sublane, (tl // sublane) * sublane)
    tl = min(tl, rows_out)
    num_tiles = pl.cdiv(rows_out, tl)

    # VMEM budget: double-buffered input + output blocks (padded) + margin.
    padded_tl = pl.cdiv(tl, sublane) * sublane
    in_block_bytes = padded_tl * lane_padded_width * itemsize
    out_block_bytes = padded_tl * lane_padded_c * itemsize
    vmem_limit = int(min(
        64 * 1024 * 1024,
        max(32 * 1024 * 1024,
            2 * (in_block_bytes + out_block_bytes) + (2 << 20))))

    kernel = functools.partial(_moving_avg_kernel,
                               kernel_size=kernel_size, channels=c)

    out_flat = pl.pallas_call(
        kernel,
        out_shape=jax.ShapeDtypeStruct((rows_out, c), x.dtype),
        grid=(num_tiles,),
        in_specs=[pl.BlockSpec((tl, row_width), lambda i: (i, 0))],
        out_specs=pl.BlockSpec((tl, c), lambda i: (i, 0)),
        compiler_params=pltpu.CompilerParams(
            dimension_semantics=("parallel",),
            vmem_limit_bytes=vmem_limit,
        ),
    )(x_windows)

    out = out_flat.reshape(b, l_out, c)
    return np.asarray(out) if convert_numpy else out


if __name__ == "__main__":
    key = jax.random.PRNGKey(0)

    cases = [
        # (B, L, C, kernel_size, block_rows, dtype)
        (2, 16, 8, 4, None, jnp.float32),    # tiny shape; single tile
        (2, 256, 8, 4, 16, jnp.float32),     # multiple row tiles, small C
        (2, 203, 8, 5, 32, jnp.float32),     # ragged tail + partial last tile
        (4, 96, 16, 3, 32, jnp.bfloat16),    # bf16 (sublane packing = 16)
        (2, 64, 256, 4, 8, jnp.float32),     # C multiple of 128 (aligned slices)
    ]

    for idx, (B, L, C, k, br, dt) in enumerate(cases):
        key, sub = jax.random.split(key)
        x = jax.random.normal(sub, (B, L, C), dtype=jnp.float32).astype(dt)

        # Force the Pallas path (min_pallas_bytes=0) so the kernel is exercised.
        out = jax.block_until_ready(
            moving_avg(x, k, block_rows=br, min_pallas_bytes=0))
        ref = _reference(x, k)

        assert out.shape == ref.shape, (idx, out.shape, ref.shape)
        tol = 1e-5 if dt == jnp.float32 else 1e-2
        assert jnp.allclose(out.astype(jnp.float32), ref.astype(jnp.float32),
                            atol=tol, rtol=tol), f"mismatch in case {idx}"

    # Also exercise the small-shape fallback path with default thresholds.
    key, sub = jax.random.split(key)
    x_small = jax.random.normal(sub, (2, 16, 8), dtype=jnp.float32)
    out_small = jax.block_until_ready(moving_avg(x_small, 4))
    assert jnp.allclose(out_small, _reference(x_small, 4), atol=1e-5, rtol=1e-5)

    print("KERNEL_OK")
</pallas_src>

<mosaic_0001>
module attributes {stable_mosaic.version = 11 : i64} {
  func.func @_moving_avg_kernel(%arg0: i32, %arg1: memref<8x32xf32, #tpu.memory_space<vmem>>, %arg2: memref<8x8xf32, #tpu.memory_space<vmem>>) attributes {dimension_semantics = [#tpu.dimension_semantics<parallel>], iteration_bounds = array<i64: 1>, scalar_prefetch = 0 : i64, scratch_operands = 0 : i64, tpu.core_type = #tpu.core_type<tc>, window_params = [{transform_indices = @transform_0, window_bounds = array<i64: 8, 32>}, {transform_indices = @transform_1, window_bounds = array<i64: 8, 8>}]} {
    %c0 = arith.constant 0 : index
    %c0_0 = arith.constant 0 : index
    %0 = vector.load %arg1[%c0, %c0_0] : memref<8x32xf32, #tpu.memory_space<vmem>>, vector<8x8xf32>
    %c0_1 = arith.constant 0 : index
    %c8 = arith.constant 8 : index
    %1 = vector.load %arg1[%c0_1, %c8] : memref<8x32xf32, #tpu.memory_space<vmem>>, vector<8x8xf32>
    %2 = arith.addf %0, %1 : vector<8x8xf32>
    %c0_2 = arith.constant 0 : index
    %c16 = arith.constant 16 : index
    %3 = vector.load %arg1[%c0_2, %c16] : memref<8x32xf32, #tpu.memory_space<vmem>>, vector<8x8xf32>
    %4 = arith.addf %2, %3 : vector<8x8xf32>
    %c0_3 = arith.constant 0 : index
    %c24 = arith.constant 24 : index
    %5 = vector.load %arg1[%c0_3, %c24] : memref<8x32xf32, #tpu.memory_space<vmem>>, vector<8x8xf32>
    %6 = arith.addf %4, %5 : vector<8x8xf32>
    %cst = arith.constant 2.500000e-01 : f32
    %7 = vector.broadcast %cst : f32 to vector<8x8xf32>
    %8 = arith.mulf %6, %7 : vector<8x8xf32>
    %c0_4 = arith.constant 0 : index
    %c0_5 = arith.constant 0 : index
    %9 = vector.load %arg2[%c0_4, %c0_5] : memref<8x8xf32, #tpu.memory_space<vmem>>, vector<8x8xf32>
    tpu.vector_store %arg2[%c0_4, %c0_5], %8 {strides = array<i32>} : memref<8x8xf32, #tpu.memory_space<vmem>>, vector<8x8xf32>,
    return
  }
  func.func @transform_0(%arg0: i32) -> (i32, i32) {
    %c0_i32 = arith.constant 0 : i32
    %c0_i32_0 = arith.constant 0 : i32
    return %arg0, %c0_i32 : i32, i32
  }
  func.func @transform_1(%arg0: i32) -> (i32, i32) {
    %c0_i32 = arith.constant 0 : i32
    %c0_i32_0 = arith.constant 0 : i32
    return %arg0, %c0_i32 : i32, i32
  }
}

</mosaic_0001>

<llo_original>
// kernel: tpu_custom_call.1
$region0: #{tpu_custom_call.1}
  #allocation0 [shape = 'u32[]', space=smem, size = 0x4, offset = 0x4, fixed_abs, tag = 'smem constant byte address 0x4 - core index']
  #allocation1 [shape = 'u32[72,128]{1,0:T(1,128)}', space=vmem, size = 0x9000, scoped, tag = 'internal scratch']
  %s0 = inlined_call_operand.hbm [shape: f32[8,32], index: 0, kind: input, shape index: {}]
  %s1 = inlined_call_operand.hbm [shape: f32[8,8], index: 1, kind: output, shape index: {}]
  %s2 = sld [smem:[#allocation0]]
  $region18: #{tpu_custom_call.1} parent=0
    _
  %s4 = ssub.s32 1, %s2
  %s5 = scalar_select 0, %s4, %s2
  $region1: #{tpu_custom_call.1} parent=0
    #allocation2 [shape = 'u8[4096]{0}', space=vmem, size = 0x1000, scoped, tag = 'input window, operand 0, single buffered']
    #allocation3 [shape = 's32[1]{0}', space=sflag, size = 0x4, scoped, tag = 'scoped memory for tpu_custom_call.1']
    #allocation4 [shape = 's32[1]{0}', space=sflag, size = 0x4, scoped, tag = 'scoped memory for tpu_custom_call.1']
    #allocation5 [shape = 'u8[4096]{0}', space=vmem, size = 0x1000, scoped, tag = 'output window, operand 0, single buffered']
    %6 = vsyncpa [#allocation3], 0
    %7 = vsyncpa [#allocation4], 0
    // Predicated region
    $region2: #{tpu_custom_call.1} parent=1 // pred_check
      _
    $region3: #{tpu_custom_call.1} parent=1 // pred_check_branch
      %9 = sbr.rel (0) target = $region5
    $region4: #{tpu_custom_call.1} parent=1 // pred_region
      %11 = vsyncadd [#allocation3], 0
      %s13 = sshll.u32 %s0, 4
      %s14 = int_to_ptr.hbm [resolvable:$true] %s13
      %s15 = sshll.u32 [#allocation2], 4
      %s16 = int_to_ptr.vmem [resolvable:$true] %s15
      %18 = dma.hbm_to_vmem [thread:$0]  %s14, 128, %s16, [#allocation3]
    $region5: #{tpu_custom_call.1} parent=1 // pred_fallthru
      _
    // Predicated region
    $region6: #{tpu_custom_call.1} parent=1 // pred_check
      _
    $region7: #{tpu_custom_call.1} parent=1 // pred_check_branch
      %20 = sbr.rel (0) target = $region9
    $region8: #{tpu_custom_call.1} parent=1 // pred_region
      %22 = dma.done [#allocation3], 128
    $region9: #{tpu_custom_call.1} parent=1 // pred_fallthru
      _
    %v23 = vld [vmem:[#allocation2] sm:$0xff]
    %25 = vrot.lane.b32.xlu0 %v23, 120
    %v26 = vpop.permute.xlu0 %25
    %v28 = vadd.f32 %v23, %v26
    %29 = vrot.lane.b32.xlu0 %v23, 112
    %v30 = vpop.permute.xlu0 %29
    %v32 = vadd.f32 %v28, %v30
    %33 = vrot.lane.b32.xlu0 %v23, 104
    %v34 = vpop.permute.xlu0 %33
    %v36 = vadd.f32 %v32, %v34
    %v37 = vmul.f32 %v36, 0.25
    %vm38 = vcmask 64512
    %39 = vst.msk [vmem:[#allocation5] sm:$0xff] %vm38, %v37
    // Predicated region
    $region10: #{tpu_custom_call.1} parent=1 // pred_check
      _
    $region11: #{tpu_custom_call.1} parent=1 // pred_check_branch
      %41 = sbr.rel (0) target = $region13
    $region12: #{tpu_custom_call.1} parent=1 // pred_region
      %43 = vsyncadd [#allocation4], 0
      %s45 = sshll.u32 [#allocation5], 4
      %s46 = int_to_ptr.vmem [resolvable:$true] %s45
      %s47 = sshll.u32 %s1, 4
      %s48 = int_to_ptr.hbm [resolvable:$true] %s47
      %50 = dma.vmem_to_hbm [thread:$0]  %s46, 128, %s48, [#allocation4]
    $region13: #{tpu_custom_call.1} parent=1 // pred_fallthru
      _
    // Predicated region
    $region14: #{tpu_custom_call.1} parent=1 // pred_check
      _
    $region15: #{tpu_custom_call.1} parent=1 // pred_check_branch
      %52 = sbr.rel (0) target = $region17
    $region16: #{tpu_custom_call.1} parent=1 // pred_region
      %54 = dma.done [#allocation4], 128
    $region17: #{tpu_custom_call.1} parent=1 // pred_fallthru
      _
    %55 = vsyncpa [#allocation3], 1
    %56 = vsyncpa [#allocation4], 1

</llo_original>
